<compile_context>
chip_gen: v7x
topology: tpu7x:2x2x1
jax: 0.10.0
libtpu: 0.0.40
codegen_flags: <defaults>
</compile_context>

<pallas_src>
import jax
import jax.numpy as jnp
from jax.experimental import pallas as pl
from jax.experimental.pallas import tpu as pltpu


def _round_up(x, m):
    return ((x + m - 1) // m) * m


def _vmem_capacity_bytes():
    try:
        return int(pltpu.get_tpu_info().vmem_capacity_bytes)
    except Exception:
        return 64 * 1024 * 1024  # v7x per-TC capacity (smallest current target)


# ---------------------------------------------------------------------------
# Kernel
# ---------------------------------------------------------------------------
def _msvae_decoder_kernel(z_ref, w1_ref, b1_ref, w2_ref, b2_ref, out_ref,
                          h_ref):
    # Layer 1 (hidden): computed once per batch tile, reused across N tiles.
    @pl.when(pl.program_id(1) == 0)
    def _():
        h = jnp.dot(z_ref[...], w1_ref[...],
                    preferred_element_type=jnp.float32)
        h = jnp.maximum(h + b1_ref[...], 0.0)          # (TM,H) + (1,H) bcast
        h_ref[...] = h.astype(h_ref.dtype)             # bf16, feeds the MXU

    # Layer 2 (logits) for this (batch tile, out_dim tile).
    logits = jnp.dot(h_ref[...], w2_ref[...],
                     preferred_element_type=jnp.float32)
    out_ref[...] = (logits + b2_ref[...]).astype(out_ref.dtype)


# ---------------------------------------------------------------------------
# Parameter preparation (do ONCE, outside the per-step forward)
# ---------------------------------------------------------------------------
def prepare_decoder_params(w1, b1, w2, b2):
    """Cast weights to bf16 and pad the logits dim to a multiple of 128.

    Weight layout is (in_features, out_features) == PyTorch weight transposed.
    Doing this once avoids per-forward astype/pad HBM traffic.
    """
    latent_dim, hidden_dim = w1.shape
    out_dim = w2.shape[1]
    out_dim_pad = max(128, _round_up(out_dim, 128))

    w1_bf = w1.astype(jnp.bfloat16)
    b1_f32 = jnp.asarray(b1, jnp.float32).reshape(1, hidden_dim)
    w2_bf = w2.astype(jnp.bfloat16)
    b2_f32 = jnp.asarray(b2, jnp.float32).reshape(1, out_dim)
    if out_dim_pad != out_dim:
        w2_bf = jnp.pad(w2_bf, ((0, 0), (0, out_dim_pad - out_dim)))
        b2_f32 = jnp.pad(b2_f32, ((0, 0), (0, out_dim_pad - out_dim)))
    return w1_bf, b1_f32, w2_bf, b2_f32


# ---------------------------------------------------------------------------
# Tile selection
# ---------------------------------------------------------------------------
def _footprint_bytes(tm, tn, n_w2_bufs, latent_dim, hidden_dim, out_itemsize):
    return (latent_dim * hidden_dim * 2 + hidden_dim * 4        # W1 + b1
            + n_w2_bufs * tn * (hidden_dim * 2 + 4)              # W2 + b2 tiles
            + 2 * tm * latent_dim * 2                            # z (x2 bufs)
            + 2 * tm * tn * out_itemsize                         # out (x2 bufs)
            + tm * hidden_dim * (2 + 4))                         # h scratch + f32 h


def _choose_tiles(B, latent_dim, hidden_dim, out_dim_pad, out_itemsize, budget):
    # Batch tile: large (long unmasked store bursts, ~0.35us/step amortized),
    # but capped so the batch grid has >= 2 steps (v7x megacore) when B allows.
    if B <= 8:
        tm = B
    else:
        tm = min(512, _round_up(-(-B // 2), 8))

    def fp(tm_, tn_, nb):
        return _footprint_bytes(tm_, tn_, nb, latent_dim, hidden_dim,
                                out_itemsize)

    while True:
        # Preferred: W2 fully resident, single-buffered.
        if fp(tm, out_dim_pad, 1) <= budget:
            return tm, out_dim_pad
        # Otherwise stream W2 in lane-aligned N tiles, double-buffered.
        tn = out_dim_pad
        while tn > 128:
            tn = max(128, _round_up(tn // 2, 128))
            if fp(tm, tn, 2) <= budget:
                return tm, tn
        if tm <= 8 or fp(tm, 128, 2) <= budget:
            return tm, 128          # best effort; vmem_limit adds margin
        tm = max(8, _round_up(tm // 2, 8))


# ---------------------------------------------------------------------------
# Forward
# ---------------------------------------------------------------------------
def msvae_decoder_forward(z, w1_bf, b1_f32, w2_bf, b2_f32,
                          max_output_dim, max_frequency,
                          out_dtype=jnp.bfloat16):
    """z: [B, latent_dim]. Params from prepare_decoder_params.

    Returns logits [B, max_output_dim, max_frequency] in out_dtype
    (bf16 default: the kernel is HBM-writeback-bound).
    """
    B, latent_dim = z.shape
    hidden_dim = w1_bf.shape[1]
    out_dim = max_output_dim * max_frequency
    out_dim_pad = w2_bf.shape[1]
    out_itemsize = jnp.dtype(out_dtype).itemsize

    # z cast is cheap (latent_dim is tiny); weights are already bf16.
    z_bf = z if z.dtype == jnp.bfloat16 else z.astype(jnp.bfloat16)

    vmem_cap = _vmem_capacity_bytes()
    tm, tn = _choose_tiles(B, latent_dim, hidden_dim, out_dim_pad,
                           out_itemsize, budget=int(vmem_cap * 0.55))
    grid = (pl.cdiv(B, tm), pl.cdiv(out_dim_pad, tn))
    w2_resident = grid[1] == 1
    n_w2_bufs = 1 if w2_resident else 2

    footprint = _footprint_bytes(tm, tn, n_w2_bufs, latent_dim, hidden_dim,
                                 out_itemsize)
    vmem_limit = int(min(vmem_cap,
                         max(32 * 1024 * 1024, footprint + (16 << 20))))

    flops = 2 * B * (latent_dim * hidden_dim + hidden_dim * out_dim_pad)
    w2_reads = 1 if w2_resident else grid[0]
    bytes_accessed = (B * latent_dim * 2
                      + w1_bf.size * 2 + b1_f32.size * 4
                      + w2_reads * (w2_bf.size * 2 + b2_f32.size * 4)
                      + B * out_dim_pad * out_itemsize)

    w2_mode = pl.Buffered(1) if w2_resident else None

    flat = pl.pallas_call(
        _msvae_decoder_kernel,
        out_shape=jax.ShapeDtypeStruct((B, out_dim_pad), out_dtype),
        grid_spec=pltpu.PrefetchScalarGridSpec(
            num_scalar_prefetch=0,
            grid=grid,
            in_specs=[
                # Streamed activation tile (double-buffered, default).
                pl.BlockSpec((tm, latent_dim), lambda i, j: (i, 0)),
                # Resident W1 / b1: constant index -> single buffer suffices.
                pl.BlockSpec((latent_dim, hidden_dim), lambda i, j: (0, 0),
                             pipeline_mode=pl.Buffered(1)),
                pl.BlockSpec((1, hidden_dim), lambda i, j: (0, 0),
                             pipeline_mode=pl.Buffered(1)),
                # W2 / b2: resident (single buffer) or streamed over N tiles.
                pl.BlockSpec((hidden_dim, tn), lambda i, j: (0, j),
                             pipeline_mode=w2_mode),
                pl.BlockSpec((1, tn), lambda i, j: (0, j),
                             pipeline_mode=w2_mode),
            ],
            # Lane-dense flat output; (B, D, F) reshape happens outside.
            out_specs=pl.BlockSpec((tm, tn), lambda i, j: (i, j)),
            scratch_shapes=[pltpu.VMEM((tm, hidden_dim), jnp.bfloat16)],
        ),
        compiler_params=pltpu.CompilerParams(
            dimension_semantics=("parallel", "arbitrary"),
            vmem_limit_bytes=vmem_limit,
        ),
        cost_estimate=pl.CostEstimate(
            flops=flops, transcendentals=0, bytes_accessed=bytes_accessed),
    )(z_bf, w1_bf, b1_f32, w2_bf, b2_f32)

    if out_dim_pad != out_dim:
        flat = flat[:, :out_dim]
    # view(-1, D, F) — pure reshape, plain-JAX glue.
    return flat.reshape(B, max_output_dim, max_frequency)


# ---------------------------------------------------------------------------
# Demo / self-test
# ---------------------------------------------------------------------------
def init_params(key, latent_dim, hidden_dim, max_output_dim, max_frequency):
    """Deterministic synthetic parameters (shapes match the PyTorch module)."""
    k1, k2, k3, k4 = jax.random.split(key, 4)
    out_dim = max_output_dim * max_frequency
    # Stored as (in_features, out_features) == PyTorch weight transposed.
    w1 = jax.random.normal(k1, (latent_dim, hidden_dim), jnp.float32) * 0.1
    b1 = jax.random.normal(k2, (1, hidden_dim), jnp.float32) * 0.1
    w2 = jax.random.normal(k3, (hidden_dim, out_dim), jnp.float32) * 0.1
    b2 = jax.random.normal(k4, (1, out_dim), jnp.float32) * 0.1
    return w1, b1, w2, b2


if __name__ == "__main__":
    # Small shapes consistent with the module's forward.
    B = 32
    latent_dim = 16
    hidden_dim = 32
    max_output_dim = 8
    max_frequency = 16   # D*F = 128 -> already lane-dense

    key = jax.random.PRNGKey(0)
    kz, kp = jax.random.split(key)
    z = jax.random.normal(kz, (B, latent_dim), jnp.float32)
    # `batch` arg of the PyTorch forward is unused; not needed here.
    w1, b1, w2, b2 = init_params(kp, latent_dim, hidden_dim,
                                 max_output_dim, max_frequency)

    # Cast / pad parameters once (outside the per-call forward).
    w1_bf, b1_f32, w2_bf, b2_f32 = prepare_decoder_params(w1, b1, w2, b2)

    logits = msvae_decoder_forward(z, w1_bf, b1_f32, w2_bf, b2_f32,
                                   max_output_dim, max_frequency)
    logits = jax.block_until_ready(logits)

    # Pure-JAX reference with the same bf16-in / f32-accumulate math.
    # TODO(synk): bf16 MXU inputs/outputs deviate from PyTorch's f32 Linear at
    # ~1e-2 relative level; pass out_dtype=jnp.float32 (and f32 weights) if
    # tighter parity is required.
    ref_h = jnp.maximum(
        jnp.dot(z.astype(jnp.bfloat16), w1.astype(jnp.bfloat16),
                preferred_element_type=jnp.float32) + b1, 0.0)
    ref = jnp.dot(ref_h.astype(jnp.bfloat16), w2.astype(jnp.bfloat16),
                  preferred_element_type=jnp.float32) + b2
    ref = ref.reshape(B, max_output_dim, max_frequency)

    assert logits.shape == (B, max_output_dim, max_frequency)
    err = float(jnp.max(jnp.abs(logits.astype(jnp.float32) - ref)))
    assert err < 2e-2, err

    print("KERNEL_OK")
</pallas_src>

<mosaic_0001>
module attributes {stable_mosaic.version = 11 : i64} {
  func.func @_msvae_decoder_kernel(%arg0: i32, %arg1: i32, %arg2: memref<16x16xbf16, #tpu.memory_space<vmem>>, %arg3: memref<16x32xbf16, #tpu.memory_space<vmem>>, %arg4: memref<1x32xf32, #tpu.memory_space<vmem>>, %arg5: memref<32x128xbf16, #tpu.memory_space<vmem>>, %arg6: memref<1x128xf32, #tpu.memory_space<vmem>>, %arg7: memref<16x128xbf16, #tpu.memory_space<vmem>>, %arg8: memref<16x32xbf16, #tpu.memory_space<vmem>>) attributes {dimension_semantics = [#tpu.dimension_semantics<parallel>, #tpu.dimension_semantics<arbitrary>], iteration_bounds = array<i64: 2, 1>, scalar_prefetch = 0 : i64, scratch_operands = 1 : i64, tpu.core_type = #tpu.core_type<tc>, window_params = [{transform_indices = @transform_0, window_bounds = array<i64: 16, 16>}, {pipeline_mode = #tpu.pipeline_mode<synchronous>, transform_indices = @transform_1, window_bounds = array<i64: 16, 32>}, {pipeline_mode = #tpu.pipeline_mode<synchronous>, transform_indices = @transform_2, window_bounds = array<i64: 1, 32>}, {pipeline_mode = #tpu.pipeline_mode<synchronous>, transform_indices = @transform_3, window_bounds = array<i64: 32, 128>}, {pipeline_mode = #tpu.pipeline_mode<synchronous>, transform_indices = @transform_4, window_bounds = array<i64: 1, 128>}, {transform_indices = @transform_5, window_bounds = array<i64: 16, 128>}]} {
    %c0_i32 = arith.constant 0 : i32
    %0 = arith.cmpi eq, %arg1, %c0_i32 : i32
    %1 = arith.extui %0 : i1 to i32
    %c0_i32_0 = arith.constant 0 : i32
    %2 = arith.cmpi ne, %1, %c0_i32_0 : i32
    scf.if %2 {
      %c0_8 = arith.constant 0 : index
      %c0_9 = arith.constant 0 : index
      %11 = vector.load %arg2[%c0_8, %c0_9] : memref<16x16xbf16, #tpu.memory_space<vmem>>, vector<16x16xbf16>
      %c0_10 = arith.constant 0 : index
      %c0_11 = arith.constant 0 : index
      %12 = vector.load %arg3[%c0_10, %c0_11] : memref<16x32xbf16, #tpu.memory_space<vmem>>, vector<16x32xbf16>
      %cst_12 = arith.constant dense<0.000000e+00> : vector<16x32xf32>
      %13 = tpu.matmul %11, %12, %cst_12 {dimension_numbers = #tpu.dot_dimension_numbers<[1], [0], [0], [1], [0, 0, 1, 1], [], []>} : vector<16x16xbf16>, vector<16x32xbf16>, vector<16x32xf32> -> vector<16x32xf32>
      %c0_13 = arith.constant 0 : index
      %c0_14 = arith.constant 0 : index
      %14 = vector.load %arg4[%c0_13, %c0_14] : memref<1x32xf32, #tpu.memory_space<vmem>>, vector<1x32xf32>
      %15 = vector.broadcast %14 : vector<1x32xf32> to vector<16x32xf32>
      %16 = arith.addf %13, %15 : vector<16x32xf32>
      %cst_15 = arith.constant 0.000000e+00 : f32
      %17 = vector.broadcast %cst_15 : f32 to vector<16x32xf32>
      %18 = arith.maximumf %16, %17 : vector<16x32xf32>
      %19 = arith.truncf %18 : vector<16x32xf32> to vector<16x32xbf16>
      %c0_16 = arith.constant 0 : index
      %c0_17 = arith.constant 0 : index
      %20 = vector.load %arg8[%c0_16, %c0_17] : memref<16x32xbf16, #tpu.memory_space<vmem>>, vector<16x32xbf16>
      tpu.vector_store %arg8[%c0_16, %c0_17], %19 {strides = array<i32>} : memref<16x32xbf16, #tpu.memory_space<vmem>>, vector<16x32xbf16>,
    } else {
    }
    %c0 = arith.constant 0 : index
    %c0_1 = arith.constant 0 : index
    %3 = vector.load %arg8[%c0, %c0_1] : memref<16x32xbf16, #tpu.memory_space<vmem>>, vector<16x32xbf16>
    %c0_2 = arith.constant 0 : index
    %c0_3 = arith.constant 0 : index
    %4 = vector.load %arg5[%c0_2, %c0_3] : memref<32x128xbf16, #tpu.memory_space<vmem>>, vector<32x128xbf16>
    %cst = arith.constant dense<0.000000e+00> : vector<16x128xf32>
    %5 = tpu.matmul %3, %4, %cst {dimension_numbers = #tpu.dot_dimension_numbers<[1], [0], [0], [1], [0, 0, 1, 1], [], []>} : vector<16x32xbf16>, vector<32x128xbf16>, vector<16x128xf32> -> vector<16x128xf32>
    %c0_4 = arith.constant 0 : index
    %c0_5 = arith.constant 0 : index
    %6 = vector.load %arg6[%c0_4, %c0_5] : memref<1x128xf32, #tpu.memory_space<vmem>>, vector<1x128xf32>
    %7 = vector.broadcast %6 : vector<1x128xf32> to vector<16x128xf32>
    %8 = arith.addf %5, %7 : vector<16x128xf32>
    %9 = arith.truncf %8 : vector<16x128xf32> to vector<16x128xbf16>
    %c0_6 = arith.constant 0 : index
    %c0_7 = arith.constant 0 : index
    %10 = vector.load %arg7[%c0_6, %c0_7] : memref<16x128xbf16, #tpu.memory_space<vmem>>, vector<16x128xbf16>
    tpu.vector_store %arg7[%c0_6, %c0_7], %9 {strides = array<i32>} : memref<16x128xbf16, #tpu.memory_space<vmem>>, vector<16x128xbf16>,
    return
  }
  func.func @transform_0(%arg0: i32, %arg1: i32) -> (i32, i32) {
    %c0_i32 = arith.constant 0 : i32
    %c0_i32_0 = arith.constant 0 : i32
    return %arg0, %c0_i32 : i32, i32
  }
  func.func @transform_1(%arg0: i32, %arg1: i32) -> (i32, i32) {
    %c0_i32 = arith.constant 0 : i32
    %c0_i32_0 = arith.constant 0 : i32
    %c0_i32_1 = arith.constant 0 : i32
    return %c0_i32, %c0_i32_0 : i32, i32
  }
  func.func @transform_2(%arg0: i32, %arg1: i32) -> (i32, i32) {
    %c0_i32 = arith.constant 0 : i32
    %c0_i32_0 = arith.constant 0 : i32
    %c0_i32_1 = arith.constant 0 : i32
    return %c0_i32, %c0_i32_0 : i32, i32
  }
  func.func @transform_3(%arg0: i32, %arg1: i32) -> (i32, i32) {
    %c0_i32 = arith.constant 0 : i32
    %c0_i32_0 = arith.constant 0 : i32
    return %c0_i32, %arg1 : i32, i32
  }
  func.func @transform_4(%arg0: i32, %arg1: i32) -> (i32, i32) {
    %c0_i32 = arith.constant 0 : i32
    %c0_i32_0 = arith.constant 0 : i32
    return %c0_i32, %arg1 : i32, i32
  }
  func.func @transform_5(%arg0: i32, %arg1: i32) -> (i32, i32) {
    %c0_i32 = arith.constant 0 : i32
    return %arg0, %arg1 : i32, i32
  }
}

</mosaic_0001>

<llo_original>
// kernel: tpu_custom_call.1
$region0: #{tpu_custom_call.1}
  #allocation0 [shape = 'u32[]', space=smem, size = 0x4, offset = 0x4, fixed_abs, tag = 'smem constant byte address 0x4 - core index']
  #allocation1 [shape = 'u32[144,128]{1,0:T(1,128)}', space=vmem, size = 0x12000, scoped, tag = 'internal scratch']
  #allocation2 [shape = 'bf16[16,32]{1,0:T(16,128)(2,1)}', space=vmem, size = 0x1000, scoped, tag = 'scratch operand']
  %s0 = inlined_call_operand.vmem [shape: bf16[32,16], index: 0, kind: input, shape index: {}]
  %s1 = inlined_call_operand.vmem [shape: bf16[16,32], index: 1, kind: input, shape index: {}]
  %s2 = inlined_call_operand.vmem [shape: f32[1,32], index: 2, kind: input, shape index: {}]
  %s3 = inlined_call_operand.vmem [shape: bf16[32,128], index: 3, kind: input, shape index: {}]
  %s4 = inlined_call_operand.vmem [shape: f32[1,128], index: 4, kind: input, shape index: {}]
  %s5 = inlined_call_operand.hbm [shape: bf16[32,128], index: 5, kind: output, shape index: {}]
  %s6 = sld [smem:[#allocation0]]
  $region57: #{tpu_custom_call.1} parent=0
    _
  %s8 = ssub.s32 1, %s6
  %s9 = scalar_select 0, %s8, %s6
  $region1: #{tpu_custom_call.1} parent=0
    #allocation3 [shape = 'u8[8192]{0}', space=vmem, size = 0x2000, scoped, tag = 'output window, operand 0']
    #allocation4 [shape = 's32[2]{0}', space=sflag, size = 0x8, scoped, tag = 'scoped memory for tpu_custom_call.1']
    %10 = vsyncpa [#allocation4], 0
    %s11 = scalar_lea.sflag [#allocation4], 1
    %12 = vsyncpa %s11, 0
    loop: start=0, step=1, limit=4
    $region2: #{tpu_custom_call.1} parent=1 // loop_pre_header
      _
    $region3: #{tpu_custom_call.1} parent=1 // loop_header
      %s14 = sphi 0, %s18
      %p15 = scmp.ge.s32.totalorder %s14, 4
      %s21 = sphi 0, %s33
      %s22 = sphi 0, %s29
      %s23 = sphi 0, %s21
      %s24 = sphi 0, %s22
      %s25 = sphi 0, %s23
      %s26 = sphi 0, %s24
      %s36 = sphi 0, %s38
      %s39 = sphi 0, %s36
      %s40 = sphi 0, %s39
      %s56 = sphi 0, %s40
      %s60 = sphi 0, %s60
      %s62 = sphi 0, %s60
      %s63 = sphi 0, %s62
      %s77 = sphi 0, %s63
      %s81 = sphi 0, %s81
      %s83 = sphi 0, %s81
      %s84 = sphi 0, %s83
      %s98 = sphi 0, %s84
      %s104 = sphi 0, %s106
      %s107 = sphi 0, %s104
      %s108 = sphi 0, %s107
      %s124 = sphi 0, %s108
      %s130 = sphi 0, %s132
      %s133 = sphi 0, %s130
      %s134 = sphi 0, %s133
      %s150 = sphi 0, %s134
      %s158 = sphi 0, %s160
      %s161 = sphi 0, %s158
      %s162 = sphi 0, %s161
      %s178 = sphi 0, %s162
    $region4: #{tpu_custom_call.1} parent=1 // loop_header_branch
      %17 = sbr.rel (%p15) target = $region8
    $region5: #{tpu_custom_call.1} parent=1 // loop_body
      %s19 = ssub.s32 %s14, 1
      %s20 = ssub.s32 %s14, 2
      %s27 = sadd.s32 1, %s22
      %p28 = scmp.ge.s32.totalorder %s27, 1
      %s29 = scalar_select %p28, 0, %s27
      %s30 = sadd.s32 1, %s21
      %s31 = scalar_select %p28, %s30, %s21
      %p32 = scmp.ge.s32.totalorder %s31, 2
      %s33 = scalar_select %p32, 0, %s31
      %s34 = ssub.s32 %s21, %s33
      %p35 = scmp.eq.s32.totalorder %s34, 0
      %s37 = sadd.s32 %s36, 1
      %s38 = scalar_select %p35, %s36, %s37
      %p41 = pneg %p35
      %p42 = scmp.eq.s32.totalorder %s14, 1
      %p43 = por %p41, %p42
      %p44 = scmp.ne.s32.totalorder %s36, %s39
      %p45 = scmp.eq.s32.totalorder %s14, 0
      %p46 = por %p44, %p45
      %p47 = scmp.ne.s32.totalorder %s36, %s39
      %p48 = scmp.eq.s32.totalorder %s19, 1
      %p49 = por %p47, %p48
      %p50 = scmp.ne.s32.totalorder %s39, %s40
      %p51 = scmp.eq.s32.totalorder %s19, 0
      %p52 = por %p50, %p51
      %p53 = scmp.ne.s32.totalorder %s39, %s40
      %p54 = scmp.eq.s32.totalorder %s20, 1
      %p55 = por %p53, %p54
      %p57 = scmp.ne.s32.totalorder %s40, %s56
      %p58 = scmp.eq.s32.totalorder %s20, 0
      %p59 = por %p57, %p58
      %s61 = sadd.s32 %s60, 1
      %p64 = scmp.eq.s32.totalorder %s14, 1
      %p65 = scmp.ne.s32.totalorder %s60, %s62
      %p66 = scmp.eq.s32.totalorder %s14, 0
      %p67 = por %p65, %p66
      %p68 = scmp.ne.s32.totalorder %s60, %s62
      %p69 = scmp.eq.s32.totalorder %s19, 1
      %p70 = por %p68, %p69
      %p71 = scmp.ne.s32.totalorder %s62, %s63
      %p72 = scmp.eq.s32.totalorder %s19, 0
      %p73 = por %p71, %p72
      %p74 = scmp.ne.s32.totalorder %s62, %s63
      %p75 = scmp.eq.s32.totalorder %s20, 1
      %p76 = por %p74, %p75
      %p78 = scmp.ne.s32.totalorder %s63, %s77
      %p79 = scmp.eq.s32.totalorder %s20, 0
      %p80 = por %p78, %p79
      %s82 = sadd.s32 %s81, 1
      %p85 = scmp.eq.s32.totalorder %s14, 1
      %p86 = scmp.ne.s32.totalorder %s81, %s83
      %p87 = scmp.eq.s32.totalorder %s14, 0
      %p88 = por %p86, %p87
      %p89 = scmp.ne.s32.totalorder %s81, %s83
      %p90 = scmp.eq.s32.totalorder %s19, 1
      %p91 = por %p89, %p90
      %p92 = scmp.ne.s32.totalorder %s83, %s84
      %p93 = scmp.eq.s32.totalorder %s19, 0
      %p94 = por %p92, %p93
      %p95 = scmp.ne.s32.totalorder %s83, %s84
      %p96 = scmp.eq.s32.totalorder %s20, 1
      %p97 = por %p95, %p96
      %p99 = scmp.ne.s32.totalorder %s84, %s98
      %p100 = scmp.eq.s32.totalorder %s20, 0
      %p101 = por %p99, %p100
      %s102 = ssub.s32 %s22, %s29
      %p103 = scmp.eq.s32.totalorder %s102, 0
      %s105 = sadd.s32 %s104, 1
      %s106 = scalar_select %p103, %s104, %s105
      %p109 = pneg %p103
      %p110 = scmp.eq.s32.totalorder %s14, 1
      %p111 = por %p109, %p110
      %p112 = scmp.ne.s32.totalorder %s104, %s107
      %p113 = scmp.eq.s32.totalorder %s14, 0
      %p114 = por %p112, %p113
      %p115 = scmp.ne.s32.totalorder %s104, %s107
      %p116 = scmp.eq.s32.totalorder %s19, 1
      %p117 = por %p115, %p116
      %p118 = scmp.ne.s32.totalorder %s107, %s108
      %p119 = scmp.eq.s32.totalorder %s19, 0
      %p120 = por %p118, %p119
      %p121 = scmp.ne.s32.totalorder %s107, %s108
      %p122 = scmp.eq.s32.totalorder %s20, 1
      %p123 = por %p121, %p122
      %p125 = scmp.ne.s32.totalorder %s108, %s124
      %p126 = scmp.eq.s32.totalorder %s20, 0
      %p127 = por %p125, %p126
      %s128 = ssub.s32 %s22, %s29
      %p129 = scmp.eq.s32.totalorder %s128, 0
      %s131 = sadd.s32 %s130, 1
      %s132 = scalar_select %p129, %s130, %s131
      %p135 = pneg %p129
      %p136 = scmp.eq.s32.totalorder %s14, 1
      %p137 = por %p135, %p136
      %p138 = scmp.ne.s32.totalorder %s130, %s133
      %p139 = scmp.eq.s32.totalorder %s14, 0
      %p140 = por %p138, %p139
      %p141 = scmp.ne.s32.totalorder %s130, %s133
      %p142 = scmp.eq.s32.totalorder %s19, 1
      %p143 = por %p141, %p142
      %p144 = scmp.ne.s32.totalorder %s133, %s134
      %p145 = scmp.eq.s32.totalorder %s19, 0
      %p146 = por %p144, %p145
      %p147 = scmp.ne.s32.totalorder %s133, %s134
      %p148 = scmp.eq.s32.totalorder %s20, 1
      %p149 = por %p147, %p148
      %p151 = scmp.ne.s32.totalorder %s134, %s150
      %p152 = scmp.eq.s32.totalorder %s20, 0
      %p153 = por %p151, %p152
      %s154 = ssub.s32 %s21, %s33
      %s155 = ssub.s32 %s22, %s29
      %s156 = sor.u32 %s154, %s155
      %p157 = scmp.eq.s32.totalorder %s156, 0
      %s159 = sadd.s32 %s158, 1
      %s160 = scalar_select %p157, %s158, %s159
      %p163 = pneg %p157
      %p164 = scmp.eq.s32.totalorder %s14, 1
      %p165 = por %p163, %p164
      %p166 = scmp.ne.s32.totalorder %s158, %s161
      %p167 = scmp.eq.s32.totalorder %s14, 0
      %p168 = por %p166, %p167
      %p169 = scmp.ne.s32.totalorder %s158, %s161
      %p170 = scmp.eq.s32.totalorder %s19, 1
      %p171 = por %p169, %p170
      %p172 = scmp.ne.s32.totalorder %s161, %s162
      %p173 = scmp.eq.s32.totalorder %s19, 0
      %p174 = por %p172, %p173
      %p175 = scmp.ne.s32.totalorder %s161, %s162
      %p176 = scmp.eq.s32.totalorder %s20, 1
      %p177 = por %p175, %p176
      %p179 = scmp.ne.s32.totalorder %s162, %s178
      %p180 = scmp.eq.s32.totalorder %s20, 0
      %p181 = por %p179, %p180
      %p182 = scmp.le.s32.totalorder 1, %s14
      %p183 = scmp.lt.s32.totalorder %s14, 3
      %p184 = pnand %p182, %p183
      %p185 = pneg %p184
      // Predicated region
      $region9: #{tpu_custom_call.1} parent=5 // pred_check
        _
      $region10: #{tpu_custom_call.1} parent=5 // pred_check_branch
        %187 = sbr.rel (%p184) target = $region12
      $region11: #{tpu_custom_call.1} parent=5 // pred_region
        %s188 = ssub.s32 %s14, 1
        // Predicated region
        $region13: #{tpu_custom_call.1} parent=11 // pred_check
          %p189 = pneg %p73
        $region14: #{tpu_custom_call.1} parent=11 // pred_check_branch
          %191 = sbr.rel (%p189) target = $region16
        $region15: #{tpu_custom_call.1} parent=11 // pred_region
          _
        $region16: #{tpu_custom_call.1} parent=11 // pred_fallthru
          _
        // Predicated region
        $region17: #{tpu_custom_call.1} parent=11 // pred_check
          %p192 = pneg %p94
        $region18: #{tpu_custom_call.1} parent=11 // pred_check_branch
          %194 = sbr.rel (%p192) target = $region20
        $region19: #{tpu_custom_call.1} parent=11 // pred_region
          _
        $region20: #{tpu_custom_call.1} parent=11 // pred_fallthru
          _
        // Predicated region
        $region21: #{tpu_custom_call.1} parent=11 // pred_check
          %p195 = pneg %p120
        $region22: #{tpu_custom_call.1} parent=11 // pred_check_branch
          %197 = sbr.rel (%p195) target = $region24
        $region23: #{tpu_custom_call.1} parent=11 // pred_region
          %p198 = scmp.lt.s32.totalorder %s24, 0
          %s199 = scalar_select %p198, %s24, 0
          %s200 = smul.addr %s199, 4
          %s201 = scalar_lea.vmem %s3, %s200
        $region24: #{tpu_custom_call.1} parent=11 // pred_fallthru
          _
        // Predicated region
        $region25: #{tpu_custom_call.1} parent=11 // pred_check
          %p202 = pneg %p146
        $region26: #{tpu_custom_call.1} parent=11 // pred_check_branch
          %204 = sbr.rel (%p202) target = $region28
        $region27: #{tpu_custom_call.1} parent=11 // pred_region
          %p205 = scmp.lt.s32.totalorder %s24, 0
          %s206 = scalar_select %p205, %s24, 0
          %s207 = scalar_lea.vmem %s4, %s206
        $region28: #{tpu_custom_call.1} parent=11 // pred_fallthru
          _
      $region12: #{tpu_custom_call.1} parent=5 // pred_fallthru
        _
      %p208 = scmp.lt.s32.totalorder %s14, 2
      // Predicated region
      $region29: #{tpu_custom_call.1} parent=5 // pred_check
        %p209 = pneg %p208
      $region30: #{tpu_custom_call.1} parent=5 // pred_check_branch
        %211 = sbr.rel (%p209) target = $region32
      $region31: #{tpu_custom_call.1} parent=5 // pred_region
        // Predicated region
        $region33: #{tpu_custom_call.1} parent=31 // pred_check
          %p212 = pneg %p46
        $region34: #{tpu_custom_call.1} parent=31 // pred_check_branch
          %214 = sbr.rel (%p212) target = $region36
        $region35: #{tpu_custom_call.1} parent=31 // pred_region
          %s215 = smul.u32 2, %s21
          %p216 = scmp.lt.s32.totalorder %s215, 3
          %s217 = scalar_select %p216, %s215, 3
          %s218 = smul.addr %s217, 4
          %s219 = scalar_lea.vmem %s0, %s218
          %s220 = smul.u32 2, %s21
        $region36: #{tpu_custom_call.1} parent=31 // pred_fallthru
          _
      $region32: #{tpu_custom_call.1} parent=5 // pred_fallthru
        _
      %p221 = scmp.le.s32.totalorder 1, %s14
      %p222 = scmp.lt.s32.totalorder %s14, 3
      %p223 = pnand %p221, %p222
      %p224 = pneg %p223
      // Predicated region
      $region37: #{tpu_custom_call.1} parent=5 // pred_check
        _
      $region38: #{tpu_custom_call.1} parent=5 // pred_check_branch
        %226 = sbr.rel (%p223) target = $region40
      $region39: #{tpu_custom_call.1} parent=5 // pred_region
        %s227 = ssub.s32 %s14, 1
        %s228 = smul.u32 2, %s23
        %p229 = scmp.lt.s32.totalorder %s228, 3
        %s230 = scalar_select %p229, %s228, 3
        %s231 = smul.addr %s230, 4
        %s232 = scalar_lea.vmem %s0, %s231
        %p233 = pneg %p52
        %p234 = pneg %p49
        %p235 = pneg %p73
        %p236 = pneg %p70
        %p237 = pneg %p94
        %p238 = pneg %p91
        %p239 = scmp.lt.s32.totalorder %s24, 0
        %s240 = scalar_select %p239, %s24, 0
        %s241 = smul.addr %s240, 4
        %s242 = scalar_lea.vmem %s3, %s241
        %p243 = pneg %p120
        %p244 = pneg %p117
        %p245 = scmp.lt.s32.totalorder %s24, 0
        %s246 = scalar_select %p245, %s24, 0
        %s247 = scalar_lea.vmem %s4, %s246
        %p248 = pneg %p146
        %p249 = pneg %p143
        %p250 = pneg %p174
        %p251 = pneg %p171
        %s252 = sand.u32 %s161, 1
        %s253 = scalar_lea.sflag [#allocation4], %s252
        %s254 = sand.u32 %s161, 1
        %s255 = smul.addr %s254, 8
        %s256 = scalar_lea.vmem [#allocation3], %s255
        %s257 = smul.u32 2, %s23
        %p258 = scmp.lt.s32.totalorder %s257, 3
        %s259 = scalar_select %p258, %s257, 3
        %s260 = smul.addr %s259, 4
        %s261 = scalar_lea.vmem %s0, %s260
        %s262 = smul.u32 2, %s23
        %p263 = scmp.lt.s32.totalorder %s24, 0
        %s264 = scalar_select %p263, %s24, 0
        %s265 = smul.addr %s264, 4
        %s266 = scalar_lea.vmem %s3, %s265
        %p267 = scmp.lt.s32.totalorder %s24, 0
        %s268 = scalar_select %p267, %s24, 0
        %s269 = scalar_lea.vmem %s4, %s268
        %s270 = smul.u32 2, %s23
        %p272 = scmp.eq.s32.totalorder %s24, 0
        // Predicated region
        $region41: #{tpu_custom_call.1} parent=39 // pred_check
          %p273 = pneg %p272
        $region42: #{tpu_custom_call.1} parent=39 // pred_check_branch
          %275 = sbr.rel (%p273) target = $region44
        $region43: #{tpu_custom_call.1} parent=39 // pred_region
          %v276 = vld [vmem:[%s261] sm:$0xf]
          %v277 = vld [vmem:[%s261 + $0x4] sm:$0xf]
          %v278 = vld [vmem:[%s1] sm:$0xf]
          %v279 = vld [vmem:[%s1 + $0x4] sm:$0xf]
          %v280 = vld [vmem:[%s2] sm:$0x1]
          %v282 = vlaneseq
          %v283 = vshrl.u32 %v282, 7
          %v284 = vsub.s32 0, %v283
          %v285 = vrot.slane %v280, %v284
          %v289 = vunpack.c.l.b16 %v276
          %v290 = vunpack.c.l.b16 %v277
          %v291 = vpack.c.b16 %v290, %v289
          %v294 = vunpack.c.l.b16 %v278
          %v295 = vunpack.c.l.b16 %v279
          %v296 = vpack.c.b16 %v295, %v294
          %vm298 = vcmask 130048
          %v300 = vsel %vm298, %v291, 0
          %302 = vmatprep.subr.bf16.mxu0 0
          %303 = vmatpush1.bf16.msra.mxu0 %v296
          %304 = vmatprep.subr.bf16.mxu0 0
          %305 = vmatpush1.bf16.msra.mxu0 0
          %306 = vmatprep.subr.bf16.mxu0 0
          %307 = vmatpush1.bf16.msra.mxu0 0
          %308 = vmatprep.subr.bf16.mxu0 0
          %309 = vmatpush1.bf16.msra.mxu0 0
          %310 = vmatprep.subr.bf16.mxu0 0
          %311 = vmatpush1.bf16.msra.mxu0 0
          %312 = vmatprep.subr.bf16.mxu0 0
          %313 = vmatpush1.bf16.msra.mxu0 0
          %314 = vmatprep.subr.bf16.mxu0 0
          %315 = vmatpush1.bf16.msra.mxu0 0
          %316 = vmatprep.subr.bf16.mxu0 0
          %317 = vmatpush1.bf16.msra.mxu0 0
          %318 = vmatprep.subr.bf16.mxu0 0
          %319 = vmatpush1.bf16.msra.mxu0 0
          %320 = vmatprep.subr.bf16.mxu0 0
          %321 = vmatpush1.bf16.msra.mxu0 0
          %322 = vmatprep.subr.bf16.mxu0 0
          %323 = vmatpush1.bf16.msra.mxu0 0
          %324 = vmatprep.subr.bf16.mxu0 0
          %325 = vmatpush1.bf16.msra.mxu0 0
          %326 = vmatprep.subr.bf16.mxu0 0
          %327 = vmatpush1.bf16.msra.mxu0 0
          %328 = vmatprep.subr.bf16.mxu0 0
          %329 = vmatpush1.bf16.msra.mxu0 0
          %330 = vmatprep.subr.bf16.mxu0 0
          %331 = vmatpush1.bf16.msra.mxu0 0
          %332 = vmatprep.subr.bf16.mxu0 0
          %333 = vmatpush1.bf16.msra.mxu0 0
          %334 = vmatprep.mubr.bf16.mxu0 0
          %335 = vmatmul.mubr.bf16.gmra.mrb[0].mxu0 %v300
          %v336 = vpop.f32.mrb[0].mxu0
          %v337 = vadd.f32 %v285, %v336
          %v338 = vpop.f32.mrb[0].mxu0
          %v339 = vpop.f32.mrb[0].mxu0
          %v340 = vadd.f32 %v285, %v339
          %v341 = vpop.f32.mrb[0].mxu0
          %342 = vdwg.mxu0
          %v343 = vmax.f32 %v337, 0.0
          %v344 = vmax.f32 %v340, 0.0
          %v345 = vpack.c.bf16 %v344, %v343
          %vm346 = vcmask 261120
          %347 = vst.msk [vmem:[#allocation2] sm:$0xff] %vm346, %v345
        $region44: #{tpu_custom_call.1} parent=39 // pred_fallthru
          _
        %v348 = vld [vmem:[#allocation2] sm:$0xff]
        %v349 = vld [vmem:[%s266] sm:$0xf]
        %v350 = vld [vmem:[%s266 + $0x4] sm:$0xf]
        %v351 = vld [vmem:[%s266 + $0x8] sm:$0xf]
        %v352 = vld [vmem:[%s266 + $0xc] sm:$0xf]
        %v353 = vld [vmem:[%s269] sm:$0x1]
        %v355 = vlaneseq
        %v356 = vshrl.u32 %v355, 7
        %v357 = vsub.s32 0, %v356
        %v358 = vrot.slane %v353, %v357
        %v364 = vunpack.c.l.b16 %v349
        %v365 = vunpack.c.l.b16 %v350
        %v366 = vunpack.c.l.b16 %v351
        %v367 = vunpack.c.l.b16 %v352
        %v368 = vpack.c.b16 %v365, %v364
        %v369 = vpack.c.b16 %v367, %v366
        %vm372 = vcmask 261120
        %v374 = vsel %vm372, %v348, 0
        %376 = vmatprep.subr.bf16.mxu0 0
        %377 = vmatpush1.bf16.msra.mxu0 %v368
        %378 = vmatprep.subr.bf16.mxu0 0
        %379 = vmatpush1.bf16.msra.mxu0 %v369
        %380 = vmatprep.subr.bf16.mxu0 0
        %381 = vmatpush1.bf16.msra.mxu0 0
        %382 = vmatprep.subr.bf16.mxu0 0
        %383 = vmatpush1.bf16.msra.mxu0 0
        %384 = vmatprep.subr.bf16.mxu0 0
        %385 = vmatpush1.bf16.msra.mxu0 0
        %386 = vmatprep.subr.bf16.mxu0 0
        %387 = vmatpush1.bf16.msra.mxu0 0
        %388 = vmatprep.subr.bf16.mxu0 0
        %389 = vmatpush1.bf16.msra.mxu0 0
        %390 = vmatprep.subr.bf16.mxu0 0
        %391 = vmatpush1.bf16.msra.mxu0 0
        %392 = vmatprep.subr.bf16.mxu0 0
        %393 = vmatpush1.bf16.msra.mxu0 0
        %394 = vmatprep.subr.bf16.mxu0 0
        %395 = vmatpush1.bf16.msra.mxu0 0
        %396 = vmatprep.subr.bf16.mxu0 0
        %397 = vmatpush1.bf16.msra.mxu0 0
        %398 = vmatprep.subr.bf16.mxu0 0
        %399 = vmatpush1.bf16.msra.mxu0 0
        %400 = vmatprep.subr.bf16.mxu0 0
        %401 = vmatpush1.bf16.msra.mxu0 0
        %402 = vmatprep.subr.bf16.mxu0 0
        %403 = vmatpush1.bf16.msra.mxu0 0
        %404 = vmatprep.subr.bf16.mxu0 0
        %405 = vmatpush1.bf16.msra.mxu0 0
        %406 = vmatprep.subr.bf16.mxu0 0
        %407 = vmatpush1.bf16.msra.mxu0 0
        %408 = vmatprep.mubr.bf16.mxu0 0
        %409 = vmatmul.mubr.bf16.gmra.mrb[0].mxu0 %v374
        %v410 = vpop.f32.mrb[0].mxu0
        %v411 = vadd.f32 %v358, %v410
        %v412 = vpop.f32.mrb[0].mxu0
        %v413 = vpop.f32.mrb[0].mxu0
        %v414 = vadd.f32 %v358, %v413
        %v415 = vpop.f32.mrb[0].mxu0
        %416 = vdwg.mxu0
        %v417 = vpack.c.bf16 %v414, %v411
        %v419 = vunpack.c.l.b16 %v417
        %v420 = vunpack.c.h.b16 %v417
        %v421 = vpack.c.b16 %v419, %v419
        %v422 = vpack.c.b16 %v420, %v420
        %425 = vst [vmem:[%s256] sm:$0xf] %v421
        %426 = vst [vmem:[%s256 + $0x4] sm:$0xf] %v422
        %s427 = sand.u32 %s161, 1
        %s428 = scalar_lea.sflag [#allocation4], %s427
        %s429 = sand.u32 %s161, 1
        %s430 = smul.addr %s429, 8
        %s431 = scalar_lea.vmem [#allocation3], %s430
        // Predicated region
        $region45: #{tpu_custom_call.1} parent=39 // pred_check
          %p432 = pneg %p171
        $region46: #{tpu_custom_call.1} parent=39 // pred_check_branch
          %434 = sbr.rel (%p432) target = $region48
        $region47: #{tpu_custom_call.1} parent=39 // pred_region
          %s435 = smul.u32 2, %s23
          %s437 = ssub.s32 128, 128
          %438 = vsyncadd %s428, %s437
          %s439 = sadd.s32 %s24, %s435
          %s440 = smul.addr %s439, 64
          %s441 = scalar_lea.hbm %s5, %s440
          %s442 = sshll.u32 %s431, 4
          %s443 = int_to_ptr.vmem [resolvable:$true] %s442
          %448 = dma.vmem_to_hbm [thread:$0]  %s443, 128, %s441, %s428, 64, 64, 4
        $region48: #{tpu_custom_call.1} parent=39 // pred_fallthru
          _
      $region40: #{tpu_custom_call.1} parent=5 // pred_fallthru
        _
      %p449 = scmp.le.s32.totalorder 2, %s14
      // Predicated region
      $region49: #{tpu_custom_call.1} parent=5 // pred_check
        %p450 = pneg %p449
      $region50: #{tpu_custom_call.1} parent=5 // pred_check_branch
        %452 = sbr.rel (%p450) target = $region52
      $region51: #{tpu_custom_call.1} parent=5 // pred_region
        %s453 = ssub.s32 %s14, 2
        // Predicated region
        $region53: #{tpu_custom_call.1} parent=51 // pred_check
          %p454 = pneg %p177
        $region54: #{tpu_custom_call.1} parent=51 // pred_check_branch
          %456 = sbr.rel (%p454) target = $region56
        $region55: #{tpu_custom_call.1} parent=51 // pred_region
          %s457 = sand.u32 %s162, 1
          %s458 = scalar_lea.sflag [#allocation4], %s457
          %s459 = sand.u32 %s162, 1
          %s460 = smul.addr %s459, 8
          %s461 = scalar_lea.vmem [#allocation3], %s460
          %462 = dma.done %s458, 128
        $region56: #{tpu_custom_call.1} parent=51 // pred_fallthru
          _
      $region52: #{tpu_custom_call.1} parent=5 // pred_fallthru
        _
    $region6: #{tpu_custom_call.1} parent=1 // loop_footer
      %s18 = sadd.s32 1, %s14
    $region7: #{tpu_custom_call.1} parent=1 // loop_footer_branch
      %13 = sbr.rel target = $region3
    $region8: #{tpu_custom_call.1} parent=1 // loop_exit
      _
    %463 = vsyncpa [#allocation4], 1
    %s464 = scalar_lea.sflag [#allocation4], 1
    %465 = vsyncpa %s464, 1

</llo_original>
